<compile_context>
chip_gen: v6e
topology: v6e:2x2x1
jax: 0.10.0
libtpu: 0.0.40
codegen_flags: <defaults>
</compile_context>

<pallas_src>
import jax
import jax.numpy as jnp
from jax.experimental import pallas as pl
from jax.experimental.pallas import tpu as pltpu


def gcn_kernel(adj_ref, x_ref, w1_ref, b1_ref, w2_ref, b2_ref, w3_ref, b3_ref,
               pool_ref, out_ref):
    adj = adj_ref[...]                                                 # (B*N, B*N) bf16

    # --- GCNLayer 1 (reassociated): (A @ x) @ W1 == A @ (x @ W1) ---
    xw1 = jnp.dot(x_ref[...], w1_ref[...],
                  preferred_element_type=jnp.float32)                  # (B*N, H) f32
    a1 = jnp.dot(adj, xw1.astype(jnp.bfloat16),
                 preferred_element_type=jnp.float32)                   # (B*N, H) f32
    h1 = jnp.maximum(a1 + b1_ref[...], 0.0)                            # f32 epilogue

    # --- GCNLayer 2 (last=True): aggregate, then Linear + ReLU ---
    a2 = jnp.dot(adj, h1.astype(jnp.bfloat16),
                 preferred_element_type=jnp.float32)                   # (B*N, H) f32
    h2 = jnp.dot(a2.astype(jnp.bfloat16), w2_ref[...],
                 preferred_element_type=jnp.float32)
    h2 = jnp.maximum(h2 + b2_ref[...], 0.0)                            # (B*N, H) f32

    # --- mean-node pooling as an MXU matmul (block-diagonal ones/N matrix) ---
    pooled = jnp.dot(pool_ref[...], h2.astype(jnp.bfloat16),
                     preferred_element_type=jnp.float32)               # (B, H) f32

    # --- final Linear ---
    out = jnp.dot(pooled.astype(jnp.bfloat16), w3_ref[...],
                  preferred_element_type=jnp.float32) + b3_ref[...]    # (B, Fout) f32
    out_ref[...] = out.astype(out_ref.dtype)


def _block_diag_adj(adj):
    """(B, N, N) per-graph adjacency -> (B*N, B*N) block-diagonal adjacency."""
    B, N, _ = adj.shape
    blocks = jnp.zeros((B, N, B, N), adj.dtype)
    idx = jnp.arange(B)
    blocks = blocks.at[idx, :, idx, :].set(adj)
    return blocks.reshape(B * N, B * N)


def gcn_forward(adj, x, params):
    """adj: (B, N, N), x: (B, N, Fin) -> (B, out_feats) float32.

    adj[b, dst, src] = 1 for edge src->dst, so sum-of-source-messages == adj @ h.
    All graphs have N real nodes (no padding).
    """
    B, N, Fin = x.shape
    w1t, b1, w2t, b2, w3t, b3 = params
    H = w1t.shape[1]
    Fout = w3t.shape[1]

    # bf16 operands (0/1 adjacency is exact); accumulation stays f32 inside the kernel.
    adj_bd = _block_diag_adj(adj).astype(jnp.bfloat16)                 # (B*N, B*N)
    x_flat = x.reshape(B * N, Fin).astype(jnp.bfloat16)                # (B*N, Fin)
    w1_bf = w1t.astype(jnp.bfloat16)
    w2_bf = w2t.astype(jnp.bfloat16)
    w3_bf = w3t.astype(jnp.bfloat16)

    # Block-diagonal mean-pooling matrix: row g has 1/N over graph g's node rows.
    # 1/N with N a power of two is exact in bf16.
    # TODO(synk): if graphs are ever zero-padded to a common N, pass per-graph node
    # counts (scalar prefetch) and build 1/n_g rows instead of 1/N.
    pool = jnp.kron(jnp.eye(B, dtype=jnp.float32),
                    jnp.full((1, N), 1.0 / N, jnp.float32)).astype(jnp.bfloat16)

    full = lambda shape: pl.BlockSpec(shape, lambda *_: (0,) * len(shape))

    # Single grid step: total working set is tens of KiB, so per-step pipeline
    # overhead (not bandwidth/compute) dominates; full-dim blocks give unmasked
    # loads/stores on every generation.
    return pl.pallas_call(
        gcn_kernel,
        out_shape=jax.ShapeDtypeStruct((B, Fout), jnp.float32),
        grid=(1,),
        in_specs=[
            full((B * N, B * N)),   # block-diagonal adjacency
            full((B * N, Fin)),     # flattened node features
            full((Fin, H)),         # W1^T
            full((1, H)),           # b1
            full((H, H)),           # W2^T
            full((1, H)),           # b2
            full((H, Fout)),        # W3^T
            full((1, Fout)),        # b3
            full((B, B * N)),       # mean-pooling matrix
        ],
        out_specs=full((B, Fout)),
        compiler_params=pltpu.CompilerParams(
            dimension_semantics=("arbitrary",),
        ),
    )(adj_bd, x_flat, w1_bf, b1, w2_bf, b2, w3_bf, b3, pool)


def gcn_reference_f32(adj, x, params):
    """Pure-f32 JAX reference of the same forward pass."""
    w1t, b1, w2t, b2, w3t, b3 = params
    h = jnp.maximum(jnp.einsum("bnm,bmf->bnf", adj, x) @ w1t + b1, 0.0)
    h = jnp.maximum(jnp.einsum("bnm,bmf->bnf", adj, h) @ w2t + b2, 0.0)
    return jnp.mean(h, axis=1) @ w3t + b3


def gcn_reference_bf16(adj, x, params):
    """Reference mirroring the kernel's bf16 operand rounding and op order."""
    w1t, b1, w2t, b2, w3t, b3 = params
    bf = lambda a: a.astype(jnp.bfloat16).astype(jnp.float32)
    B, N, Fin = x.shape
    A = bf(_block_diag_adj(adj))
    xf = bf(x.reshape(B * N, Fin))
    pool = bf(jnp.kron(jnp.eye(B, dtype=jnp.float32),
                       jnp.full((1, N), 1.0 / N, jnp.float32)))
    xw1 = xf @ bf(w1t)
    h1 = jnp.maximum(A @ bf(xw1) + b1, 0.0)
    a2 = A @ bf(h1)
    h2 = jnp.maximum(bf(a2) @ bf(w2t) + b2, 0.0)
    pooled = pool @ bf(h2)
    return bf(pooled) @ bf(w3t) + b3


def init_params(key, in_feats, hidden, out_feats):
    """Deterministic nn.Linear-style init; weights stored pre-transposed (Fin, Fout)."""
    ks = jax.random.split(key, 6)

    def linear(kw, kb, fi, fo):
        bound = 1.0 / jnp.sqrt(fi)
        w = jax.random.uniform(kw, (fi, fo), jnp.float32, -bound, bound)
        b = jax.random.uniform(kb, (1, fo), jnp.float32, -bound, bound)
        return w, b

    w1t, b1 = linear(ks[0], ks[1], in_feats, hidden)
    w2t, b2 = linear(ks[2], ks[3], hidden, hidden)
    w3t, b3 = linear(ks[4], ks[5], hidden, out_feats)
    return (w1t, b1, w2t, b2, w3t, b3)


if __name__ == "__main__":
    B, N = 8, 8                         # 8 graphs, 8 nodes each
    in_feats, hidden, out_feats = 16, 32, 4

    key = jax.random.PRNGKey(0)
    k_adj, k_x, k_p = jax.random.split(key, 3)

    # random directed adjacency (adj[b, dst, src] = 1 for edge src->dst), no self loops
    adj = (jax.random.uniform(k_adj, (B, N, N)) < 0.4).astype(jnp.float32)
    adj = adj * (1.0 - jnp.eye(N, dtype=jnp.float32)[None])

    x = jax.random.normal(k_x, (B, N, in_feats), dtype=jnp.float32)
    params = init_params(k_p, in_feats, hidden, out_feats)

    out = gcn_forward(adj, x, params)
    out = jax.block_until_ready(out)
    assert out.shape == (B, out_feats)

    ref_bf16 = gcn_reference_bf16(adj, x, params)   # same precision as the kernel
    ref_f32 = gcn_reference_f32(adj, x, params)     # full-precision semantics check
    assert jnp.allclose(out, ref_bf16, atol=5e-3, rtol=5e-3)
    assert jnp.allclose(out, ref_f32, atol=5e-2, rtol=5e-2)

    print("KERNEL_OK")
</pallas_src>

<mosaic_0001>
module attributes {stable_mosaic.version = 11 : i64} {
  func.func @gcn_kernel(%arg0: i32, %arg1: memref<64x64xbf16, #tpu.memory_space<vmem>>, %arg2: memref<64x16xbf16, #tpu.memory_space<vmem>>, %arg3: memref<16x32xbf16, #tpu.memory_space<vmem>>, %arg4: memref<1x32xf32, #tpu.memory_space<vmem>>, %arg5: memref<32x32xbf16, #tpu.memory_space<vmem>>, %arg6: memref<1x32xf32, #tpu.memory_space<vmem>>, %arg7: memref<32x4xbf16, #tpu.memory_space<vmem>>, %arg8: memref<1x4xf32, #tpu.memory_space<vmem>>, %arg9: memref<8x64xbf16, #tpu.memory_space<vmem>>, %arg10: memref<8x4xf32, #tpu.memory_space<vmem>>) attributes {dimension_semantics = [#tpu.dimension_semantics<arbitrary>], iteration_bounds = array<i64: 1>, scalar_prefetch = 0 : i64, scratch_operands = 0 : i64, tpu.core_type = #tpu.core_type<tc>, window_params = [{pipeline_mode = #tpu.pipeline_mode<synchronous>, transform_indices = @transform_0, window_bounds = array<i64: 64, 64>}, {pipeline_mode = #tpu.pipeline_mode<synchronous>, transform_indices = @transform_1, window_bounds = array<i64: 64, 16>}, {pipeline_mode = #tpu.pipeline_mode<synchronous>, transform_indices = @transform_2, window_bounds = array<i64: 16, 32>}, {pipeline_mode = #tpu.pipeline_mode<synchronous>, transform_indices = @transform_3, window_bounds = array<i64: 1, 32>}, {pipeline_mode = #tpu.pipeline_mode<synchronous>, transform_indices = @transform_4, window_bounds = array<i64: 32, 32>}, {pipeline_mode = #tpu.pipeline_mode<synchronous>, transform_indices = @transform_5, window_bounds = array<i64: 1, 32>}, {pipeline_mode = #tpu.pipeline_mode<synchronous>, transform_indices = @transform_6, window_bounds = array<i64: 32, 4>}, {pipeline_mode = #tpu.pipeline_mode<synchronous>, transform_indices = @transform_7, window_bounds = array<i64: 1, 4>}, {pipeline_mode = #tpu.pipeline_mode<synchronous>, transform_indices = @transform_8, window_bounds = array<i64: 8, 64>}, {pipeline_mode = #tpu.pipeline_mode<synchronous>, transform_indices = @transform_9, window_bounds = array<i64: 8, 4>}]} {
    %c0 = arith.constant 0 : index
    %c0_0 = arith.constant 0 : index
    %0 = vector.load %arg1[%c0, %c0_0] : memref<64x64xbf16, #tpu.memory_space<vmem>>, vector<64x64xbf16>
    %c0_1 = arith.constant 0 : index
    %c0_2 = arith.constant 0 : index
    %1 = vector.load %arg2[%c0_1, %c0_2] : memref<64x16xbf16, #tpu.memory_space<vmem>>, vector<64x16xbf16>
    %c0_3 = arith.constant 0 : index
    %c0_4 = arith.constant 0 : index
    %2 = vector.load %arg3[%c0_3, %c0_4] : memref<16x32xbf16, #tpu.memory_space<vmem>>, vector<16x32xbf16>
    %cst = arith.constant dense<0.000000e+00> : vector<64x32xf32>
    %3 = tpu.matmul %1, %2, %cst {dimension_numbers = #tpu.dot_dimension_numbers<[1], [0], [0], [1], [0, 0, 1, 1], [], []>} : vector<64x16xbf16>, vector<16x32xbf16>, vector<64x32xf32> -> vector<64x32xf32>
    %4 = arith.truncf %3 : vector<64x32xf32> to vector<64x32xbf16>
    %cst_5 = arith.constant dense<0.000000e+00> : vector<64x32xf32>
    %5 = tpu.matmul %0, %4, %cst_5 {dimension_numbers = #tpu.dot_dimension_numbers<[1], [0], [0], [1], [0, 0, 1, 1], [], []>} : vector<64x64xbf16>, vector<64x32xbf16>, vector<64x32xf32> -> vector<64x32xf32>
    %c0_6 = arith.constant 0 : index
    %c0_7 = arith.constant 0 : index
    %6 = vector.load %arg4[%c0_6, %c0_7] : memref<1x32xf32, #tpu.memory_space<vmem>>, vector<1x32xf32>
    %7 = vector.broadcast %6 : vector<1x32xf32> to vector<64x32xf32>
    %8 = arith.addf %5, %7 : vector<64x32xf32>
    %cst_8 = arith.constant 0.000000e+00 : f32
    %9 = vector.broadcast %cst_8 : f32 to vector<64x32xf32>
    %10 = arith.maximumf %8, %9 : vector<64x32xf32>
    %11 = arith.truncf %10 : vector<64x32xf32> to vector<64x32xbf16>
    %cst_9 = arith.constant dense<0.000000e+00> : vector<64x32xf32>
    %12 = tpu.matmul %0, %11, %cst_9 {dimension_numbers = #tpu.dot_dimension_numbers<[1], [0], [0], [1], [0, 0, 1, 1], [], []>} : vector<64x64xbf16>, vector<64x32xbf16>, vector<64x32xf32> -> vector<64x32xf32>
    %13 = arith.truncf %12 : vector<64x32xf32> to vector<64x32xbf16>
    %c0_10 = arith.constant 0 : index
    %c0_11 = arith.constant 0 : index
    %14 = vector.load %arg5[%c0_10, %c0_11] : memref<32x32xbf16, #tpu.memory_space<vmem>>, vector<32x32xbf16>
    %cst_12 = arith.constant dense<0.000000e+00> : vector<64x32xf32>
    %15 = tpu.matmul %13, %14, %cst_12 {dimension_numbers = #tpu.dot_dimension_numbers<[1], [0], [0], [1], [0, 0, 1, 1], [], []>} : vector<64x32xbf16>, vector<32x32xbf16>, vector<64x32xf32> -> vector<64x32xf32>
    %c0_13 = arith.constant 0 : index
    %c0_14 = arith.constant 0 : index
    %16 = vector.load %arg6[%c0_13, %c0_14] : memref<1x32xf32, #tpu.memory_space<vmem>>, vector<1x32xf32>
    %17 = vector.broadcast %16 : vector<1x32xf32> to vector<64x32xf32>
    %18 = arith.addf %15, %17 : vector<64x32xf32>
    %cst_15 = arith.constant 0.000000e+00 : f32
    %19 = vector.broadcast %cst_15 : f32 to vector<64x32xf32>
    %20 = arith.maximumf %18, %19 : vector<64x32xf32>
    %c0_16 = arith.constant 0 : index
    %c0_17 = arith.constant 0 : index
    %21 = vector.load %arg9[%c0_16, %c0_17] : memref<8x64xbf16, #tpu.memory_space<vmem>>, vector<8x64xbf16>
    %22 = arith.truncf %20 : vector<64x32xf32> to vector<64x32xbf16>
    %cst_18 = arith.constant dense<0.000000e+00> : vector<8x32xf32>
    %23 = tpu.matmul %21, %22, %cst_18 {dimension_numbers = #tpu.dot_dimension_numbers<[1], [0], [0], [1], [0, 0, 1, 1], [], []>} : vector<8x64xbf16>, vector<64x32xbf16>, vector<8x32xf32> -> vector<8x32xf32>
    %24 = arith.truncf %23 : vector<8x32xf32> to vector<8x32xbf16>
    %c0_19 = arith.constant 0 : index
    %c0_20 = arith.constant 0 : index
    %25 = vector.load %arg7[%c0_19, %c0_20] : memref<32x4xbf16, #tpu.memory_space<vmem>>, vector<32x4xbf16>
    %cst_21 = arith.constant dense<0.000000e+00> : vector<8x4xf32>
    %26 = tpu.matmul %24, %25, %cst_21 {dimension_numbers = #tpu.dot_dimension_numbers<[1], [0], [0], [1], [0, 0, 1, 1], [], []>} : vector<8x32xbf16>, vector<32x4xbf16>, vector<8x4xf32> -> vector<8x4xf32>
    %c0_22 = arith.constant 0 : index
    %c0_23 = arith.constant 0 : index
    %27 = vector.load %arg8[%c0_22, %c0_23] : memref<1x4xf32, #tpu.memory_space<vmem>>, vector<1x4xf32>
    %28 = vector.broadcast %27 : vector<1x4xf32> to vector<8x4xf32>
    %29 = arith.addf %26, %28 : vector<8x4xf32>
    %c0_24 = arith.constant 0 : index
    %c0_25 = arith.constant 0 : index
    %30 = vector.load %arg10[%c0_24, %c0_25] : memref<8x4xf32, #tpu.memory_space<vmem>>, vector<8x4xf32>
    tpu.vector_store %arg10[%c0_24, %c0_25], %29 {strides = array<i32>} : memref<8x4xf32, #tpu.memory_space<vmem>>, vector<8x4xf32>,
    return
  }
  func.func @transform_0(%arg0: i32) -> (i32, i32) {
    %c0_i32 = arith.constant 0 : i32
    %c0_i32_0 = arith.constant 0 : i32
    %c0_i32_1 = arith.constant 0 : i32
    return %c0_i32, %c0_i32_0 : i32, i32
  }
  func.func @transform_1(%arg0: i32) -> (i32, i32) {
    %c0_i32 = arith.constant 0 : i32
    %c0_i32_0 = arith.constant 0 : i32
    %c0_i32_1 = arith.constant 0 : i32
    return %c0_i32, %c0_i32_0 : i32, i32
  }
  func.func @transform_2(%arg0: i32) -> (i32, i32) {
    %c0_i32 = arith.constant 0 : i32
    %c0_i32_0 = arith.constant 0 : i32
    %c0_i32_1 = arith.constant 0 : i32
    return %c0_i32, %c0_i32_0 : i32, i32
  }
  func.func @transform_3(%arg0: i32) -> (i32, i32) {
    %c0_i32 = arith.constant 0 : i32
    %c0_i32_0 = arith.constant 0 : i32
    %c0_i32_1 = arith.constant 0 : i32
    return %c0_i32, %c0_i32_0 : i32, i32
  }
  func.func @transform_4(%arg0: i32) -> (i32, i32) {
    %c0_i32 = arith.constant 0 : i32
    %c0_i32_0 = arith.constant 0 : i32
    %c0_i32_1 = arith.constant 0 : i32
    return %c0_i32, %c0_i32_0 : i32, i32
  }
  func.func @transform_5(%arg0: i32) -> (i32, i32) {
    %c0_i32 = arith.constant 0 : i32
    %c0_i32_0 = arith.constant 0 : i32
    %c0_i32_1 = arith.constant 0 : i32
    return %c0_i32, %c0_i32_0 : i32, i32
  }
  func.func @transform_6(%arg0: i32) -> (i32, i32) {
    %c0_i32 = arith.constant 0 : i32
    %c0_i32_0 = arith.constant 0 : i32
    %c0_i32_1 = arith.constant 0 : i32
    return %c0_i32, %c0_i32_0 : i32, i32
  }
  func.func @transform_7(%arg0: i32) -> (i32, i32) {
    %c0_i32 = arith.constant 0 : i32
    %c0_i32_0 = arith.constant 0 : i32
    %c0_i32_1 = arith.constant 0 : i32
    return %c0_i32, %c0_i32_0 : i32, i32
  }
  func.func @transform_8(%arg0: i32) -> (i32, i32) {
    %c0_i32 = arith.constant 0 : i32
    %c0_i32_0 = arith.constant 0 : i32
    %c0_i32_1 = arith.constant 0 : i32
    return %c0_i32, %c0_i32_0 : i32, i32
  }
  func.func @transform_9(%arg0: i32) -> (i32, i32) {
    %c0_i32 = arith.constant 0 : i32
    %c0_i32_0 = arith.constant 0 : i32
    %c0_i32_1 = arith.constant 0 : i32
    return %c0_i32, %c0_i32_0 : i32, i32
  }
}

</mosaic_0001>

<llo_original>
// kernel: tpu_custom_call.1
$region0: #{tpu_custom_call.1}
  #allocation0 [shape = 'u32[]', space=smem, size = 0x4, offset = 0x4, fixed_abs, tag = 'smem constant byte address 0x4 - core index']
  #allocation1 [shape = 'u32[144,128]{1,0:T(1,128)}', space=vmem, size = 0x12000, scoped, tag = 'internal scratch']
  %s0 = inlined_call_operand.vmem [shape: bf16[64,64], index: 0, kind: input, shape index: {}]
  %s1 = inlined_call_operand.vmem [shape: bf16[64,16], index: 1, kind: input, shape index: {}]
  %s2 = inlined_call_operand.hbm [shape: bf16[16,32], index: 2, kind: input, shape index: {}]
  %s3 = inlined_call_operand.vmem [shape: f32[1,32], index: 3, kind: input, shape index: {}]
  %s4 = inlined_call_operand.vmem [shape: bf16[32,32], index: 4, kind: input, shape index: {}]
  %s5 = inlined_call_operand.vmem [shape: f32[1,32], index: 5, kind: input, shape index: {}]
  %s6 = inlined_call_operand.vmem [shape: bf16[32,4], index: 6, kind: input, shape index: {}]
  %s7 = inlined_call_operand.vmem [shape: f32[1,4], index: 7, kind: input, shape index: {}]
  %s8 = inlined_call_operand.vmem [shape: bf16[8,64], index: 8, kind: input, shape index: {}]
  %s9 = inlined_call_operand.vmem [shape: f32[8,4], index: 9, kind: output, shape index: {}]
  %s10 = sld [smem:[#allocation0]]
  $region50: #{tpu_custom_call.1} parent=0
    _
  %s12 = ssub.s32 1, %s10
  %s13 = scalar_select 0, %s12, %s10
  $region1: #{tpu_custom_call.1} parent=0
    #allocation2 [shape = 'u8[4096]{0}', space=vmem, size = 0x1000, scoped, tag = 'input window, operand 2, single buffered']
    #allocation3 [shape = 's32[1]{0}', space=sflag, size = 0x4, scoped, tag = 'scoped memory for tpu_custom_call.1']
    %14 = vsyncpa [#allocation3], 0
    // Predicated region
    $region2: #{tpu_custom_call.1} parent=1 // pred_check
      _
    $region3: #{tpu_custom_call.1} parent=1 // pred_check_branch
      %16 = sbr.rel (0) target = $region5
    $region4: #{tpu_custom_call.1} parent=1 // pred_region
      _
    $region5: #{tpu_custom_call.1} parent=1 // pred_fallthru
      _
    // Predicated region
    $region6: #{tpu_custom_call.1} parent=1 // pred_check
      _
    $region7: #{tpu_custom_call.1} parent=1 // pred_check_branch
      %18 = sbr.rel (0) target = $region9
    $region8: #{tpu_custom_call.1} parent=1 // pred_region
      _
    $region9: #{tpu_custom_call.1} parent=1 // pred_fallthru
      _
    // Predicated region
    $region10: #{tpu_custom_call.1} parent=1 // pred_check
      _
    $region11: #{tpu_custom_call.1} parent=1 // pred_check_branch
      %20 = sbr.rel (0) target = $region13
    $region12: #{tpu_custom_call.1} parent=1 // pred_region
      %s22 = ssub.s32 128, 128
      %23 = vsyncadd [#allocation3], %s22
      %s24 = sshll.u32 [#allocation2], 4
      %s25 = int_to_ptr.vmem [resolvable:$true] %s24
      %30 = dma.hbm_to_vmem [thread:$0]  %s2, 128, %s25, [#allocation3], 64, 64, 4
    $region13: #{tpu_custom_call.1} parent=1 // pred_fallthru
      _
    // Predicated region
    $region14: #{tpu_custom_call.1} parent=1 // pred_check
      _
    $region15: #{tpu_custom_call.1} parent=1 // pred_check_branch
      %32 = sbr.rel (0) target = $region17
    $region16: #{tpu_custom_call.1} parent=1 // pred_region
      _
    $region17: #{tpu_custom_call.1} parent=1 // pred_fallthru
      _
    // Predicated region
    $region18: #{tpu_custom_call.1} parent=1 // pred_check
      _
    $region19: #{tpu_custom_call.1} parent=1 // pred_check_branch
      %34 = sbr.rel (0) target = $region21
    $region20: #{tpu_custom_call.1} parent=1 // pred_region
      _
    $region21: #{tpu_custom_call.1} parent=1 // pred_fallthru
      _
    // Predicated region
    $region22: #{tpu_custom_call.1} parent=1 // pred_check
      _
    $region23: #{tpu_custom_call.1} parent=1 // pred_check_branch
      %36 = sbr.rel (0) target = $region25
    $region24: #{tpu_custom_call.1} parent=1 // pred_region
      _
    $region25: #{tpu_custom_call.1} parent=1 // pred_fallthru
      _
    // Predicated region
    $region26: #{tpu_custom_call.1} parent=1 // pred_check
      _
    $region27: #{tpu_custom_call.1} parent=1 // pred_check_branch
      %38 = sbr.rel (0) target = $region29
    $region28: #{tpu_custom_call.1} parent=1 // pred_region
      _
    $region29: #{tpu_custom_call.1} parent=1 // pred_fallthru
      _
    // Predicated region
    $region30: #{tpu_custom_call.1} parent=1 // pred_check
      _
    $region31: #{tpu_custom_call.1} parent=1 // pred_check_branch
      %40 = sbr.rel (0) target = $region33
    $region32: #{tpu_custom_call.1} parent=1 // pred_region
      _
    $region33: #{tpu_custom_call.1} parent=1 // pred_fallthru
      _
    // Predicated region
    $region34: #{tpu_custom_call.1} parent=1 // pred_check
      _
    $region35: #{tpu_custom_call.1} parent=1 // pred_check_branch
      %42 = sbr.rel (0) target = $region37
    $region36: #{tpu_custom_call.1} parent=1 // pred_region
      _
    $region37: #{tpu_custom_call.1} parent=1 // pred_fallthru
      _
    // Predicated region
    $region38: #{tpu_custom_call.1} parent=1 // pred_check
      _
    $region39: #{tpu_custom_call.1} parent=1 // pred_check_branch
      %44 = sbr.rel (0) target = $region41
    $region40: #{tpu_custom_call.1} parent=1 // pred_region
      %45 = dma.done [#allocation3], 128
    $region41: #{tpu_custom_call.1} parent=1 // pred_fallthru
      _
    %v47 = vld [vmem:[%s0] sm:$0xf]
    %v48 = vld [vmem:[%s0 + $0x4] sm:$0xf]
    %v49 = vld [vmem:[%s0 + $0x8] sm:$0xf]
    %v50 = vld [vmem:[%s0 + $0xc] sm:$0xf]
    %v51 = vld [vmem:[%s0 + $0x10] sm:$0xf]
    %v52 = vld [vmem:[%s0 + $0x14] sm:$0xf]
    %v53 = vld [vmem:[%s0 + $0x18] sm:$0xf]
    %v54 = vld [vmem:[%s0 + $0x1c] sm:$0xf]
    %v55 = vld [vmem:[%s1] sm:$0xf]
    %v56 = vld [vmem:[%s1 + $0x4] sm:$0xf]
    %v57 = vld [vmem:[%s1 + $0x8] sm:$0xf]
    %v58 = vld [vmem:[%s1 + $0xc] sm:$0xf]
    %v59 = vld [vmem:[%s1 + $0x10] sm:$0xf]
    %v60 = vld [vmem:[%s1 + $0x14] sm:$0xf]
    %v61 = vld [vmem:[%s1 + $0x18] sm:$0xf]
    %v62 = vld [vmem:[%s1 + $0x1c] sm:$0xf]
    %v63 = vld [vmem:[#allocation2] sm:$0xf]
    %v64 = vld [vmem:[#allocation2 + $0x4] sm:$0xf]
    %v73 = vunpack.c.l.b16 %v55
    %v74 = vunpack.c.l.b16 %v56
    %v75 = vunpack.c.l.b16 %v57
    %v76 = vunpack.c.l.b16 %v58
    %v77 = vunpack.c.l.b16 %v59
    %v78 = vunpack.c.l.b16 %v60
    %v79 = vunpack.c.l.b16 %v61
    %v80 = vunpack.c.l.b16 %v62
    %v81 = vpack.c.b16 %v74, %v73
    %v82 = vpack.c.b16 %v76, %v75
    %v83 = vpack.c.b16 %v78, %v77
    %v84 = vpack.c.b16 %v80, %v79
    %v87 = vunpack.c.l.b16 %v63
    %v88 = vunpack.c.l.b16 %v64
    %v89 = vpack.c.b16 %v88, %v87
    %vm91 = vcmask 130048
    %v93 = vsel %vm91, %v81, 0
    %v96 = vsel %vm91, %v82, 0
    %v99 = vsel %vm91, %v83, 0
    %v102 = vsel %vm91, %v84, 0
    %104 = vmatprep.subr.bf16.mxu0 0
    %105 = vmatpush1.bf16.msra.mxu0 0
    %106 = vmatprep.subr.bf16.mxu0 0
    %107 = vmatpush1.bf16.msra.mxu0 0
    %108 = vmatprep.subr.bf16.mxu0 0
    %109 = vmatpush1.bf16.msra.mxu0 0
    %110 = vmatprep.subr.bf16.mxu0 0
    %111 = vmatpush1.bf16.msra.mxu0 0
    %112 = vmatprep.subr.bf16.mxu0 0
    %113 = vmatpush1.bf16.msra.mxu0 0
    %114 = vmatprep.subr.bf16.mxu0 0
    %115 = vmatpush1.bf16.msra.mxu0 0
    %116 = vmatprep.subr.bf16.mxu0 0
    %117 = vmatpush1.bf16.msra.mxu0 0
    %118 = vmatprep.subr.bf16.mxu0 0
    %119 = vmatpush1.bf16.msra.mxu0 %v89
    %120 = vmatprep.subr.bf16.mxu0 0
    %121 = vmatpush2.bf16.msra.mxu0 0
    %122 = vmatprep.subr.bf16.mxu0 0
    %123 = vmatpush2.bf16.msra.mxu0 0
    %124 = vmatprep.subr.bf16.mxu0 0
    %125 = vmatpush2.bf16.msra.mxu0 0
    %126 = vmatprep.subr.bf16.mxu0 0
    %127 = vmatpush2.bf16.msra.mxu0 0
    %128 = vmatprep.subr.bf16.mxu0 0
    %129 = vmatpush2.bf16.msra.mxu0 0
    %130 = vmatprep.subr.bf16.mxu0 0
    %131 = vmatpush2.bf16.msra.mxu0 0
    %132 = vmatprep.subr.bf16.mxu0 0
    %133 = vmatpush2.bf16.msra.mxu0 0
    %134 = vmatprep.subr.bf16.mxu0 0
    %135 = vmatpush2.bf16.msra.mxu0 0
    %136 = vmatprep.mubr.bf16.mxu0 0
    %137 = vmatmul.mubr.bf16.gmra.mxu0 %v93
    %v138 = vpop.f32.mrf.mxu0
    %v139 = vadd.f32 0.0, %v138
    %v140 = vpop.f32.mrf.mxu0
    %v141 = vpop.f32.mrf.mxu0
    %v142 = vadd.f32 0.0, %v141
    %v143 = vpop.f32.mrf.mxu0
    %144 = vmatprep.mubr.bf16.mxu0 0
    %145 = vmatmul.mubr.bf16.gmra.mxu0 %v96
    %v146 = vpop.f32.mrf.mxu0
    %v147 = vadd.f32 0.0, %v146
    %v148 = vpop.f32.mrf.mxu0
    %v149 = vpop.f32.mrf.mxu0
    %v150 = vadd.f32 0.0, %v149
    %v151 = vpop.f32.mrf.mxu0
    %152 = vmatprep.mubr.bf16.mxu0 0
    %153 = vmatmul.mubr.bf16.gmra.mxu0 %v99
    %v154 = vpop.f32.mrf.mxu0
    %v155 = vadd.f32 0.0, %v154
    %v156 = vpop.f32.mrf.mxu0
    %v157 = vpop.f32.mrf.mxu0
    %v158 = vadd.f32 0.0, %v157
    %v159 = vpop.f32.mrf.mxu0
    %160 = vmatprep.mubr.bf16.mxu0 0
    %161 = vmatmul.mubr.bf16.gmra.mxu0 %v102
    %v162 = vpop.f32.mrf.mxu0
    %v163 = vadd.f32 0.0, %v162
    %v164 = vpop.f32.mrf.mxu0
    %v165 = vpop.f32.mrf.mxu0
    %v166 = vadd.f32 0.0, %v165
    %v167 = vpop.f32.mrf.mxu0
    %168 = vdwg.mxu0
    %v169 = vpack.c.bf16 %v142, %v139
    %v170 = vpack.c.bf16 %v150, %v147
    %v171 = vpack.c.bf16 %v158, %v155
    %v172 = vpack.c.bf16 %v166, %v163
    %v173 = vld [vmem:[%s3] sm:$0x1]
    %v175 = vlaneseq
    %v176 = vshrl.u32 %v175, 7
    %v177 = vsub.s32 0, %v176
    %v178 = vrot.slane %v173, %v177
    %v188 = vunpack.c.l.b16 %v47
    %v189 = vunpack.c.l.b16 %v48
    %v190 = vunpack.c.l.b16 %v49
    %v191 = vunpack.c.l.b16 %v50
    %v192 = vunpack.c.l.b16 %v51
    %v193 = vunpack.c.l.b16 %v52
    %v194 = vunpack.c.l.b16 %v53
    %v195 = vunpack.c.l.b16 %v54
    %v196 = vpack.c.b16 %v189, %v188
    %v197 = vpack.c.b16 %v191, %v190
    %v198 = vpack.c.b16 %v193, %v192
    %v199 = vpack.c.b16 %v195, %v194
    %vm200 = vcmask 523264
    %v202 = vsel %vm200, %v196, 0
    %v205 = vsel %vm200, %v197, 0
    %v208 = vsel %vm200, %v198, 0
    %v211 = vsel %vm200, %v199, 0
    %213 = vmatprep.subr.bf16.mxu0 0
    %214 = vmatpush1.bf16.msra.mxu0 0
    %215 = vmatprep.subr.bf16.mxu0 0
    %216 = vmatpush1.bf16.msra.mxu0 0
    %217 = vmatprep.subr.bf16.mxu0 0
    %218 = vmatpush1.bf16.msra.mxu0 0
    %219 = vmatprep.subr.bf16.mxu0 0
    %220 = vmatpush1.bf16.msra.mxu0 0
    %221 = vmatprep.subr.bf16.mxu0 0
    %222 = vmatpush1.bf16.msra.mxu0 %v172
    %223 = vmatprep.subr.bf16.mxu0 0
    %224 = vmatpush1.bf16.msra.mxu0 %v171
    %225 = vmatprep.subr.bf16.mxu0 0
    %226 = vmatpush1.bf16.msra.mxu0 %v170
    %227 = vmatprep.subr.bf16.mxu0 0
    %228 = vmatpush1.bf16.msra.mxu0 %v169
    %229 = vmatprep.subr.bf16.mxu0 0
    %230 = vmatpush2.bf16.msra.mxu0 0
    %231 = vmatprep.subr.bf16.mxu0 0
    %232 = vmatpush2.bf16.msra.mxu0 0
    %233 = vmatprep.subr.bf16.mxu0 0
    %234 = vmatpush2.bf16.msra.mxu0 0
    %235 = vmatprep.subr.bf16.mxu0 0
    %236 = vmatpush2.bf16.msra.mxu0 0
    %237 = vmatprep.subr.bf16.mxu0 0
    %238 = vmatpush2.bf16.msra.mxu0 0
    %239 = vmatprep.subr.bf16.mxu0 0
    %240 = vmatpush2.bf16.msra.mxu0 0
    %241 = vmatprep.subr.bf16.mxu0 0
    %242 = vmatpush2.bf16.msra.mxu0 0
    %243 = vmatprep.subr.bf16.mxu0 0
    %244 = vmatpush2.bf16.msra.mxu0 0
    %245 = vmatprep.mubr.bf16.mxu0 0
    %246 = vmatmul.mubr.bf16.gmra.mxu0 %v202
    %v247 = vpop.f32.mrf.mxu0
    %v248 = vadd.f32 %v178, %v247
    %v249 = vpop.f32.mrf.mxu0
    %v250 = vpop.f32.mrf.mxu0
    %v251 = vadd.f32 %v178, %v250
    %v252 = vpop.f32.mrf.mxu0
    %253 = vmatprep.mubr.bf16.mxu0 0
    %254 = vmatmul.mubr.bf16.gmra.mxu0 %v205
    %v255 = vpop.f32.mrf.mxu0
    %v256 = vadd.f32 %v178, %v255
    %v257 = vpop.f32.mrf.mxu0
    %v258 = vpop.f32.mrf.mxu0
    %v259 = vadd.f32 %v178, %v258
    %v260 = vpop.f32.mrf.mxu0
    %261 = vmatprep.mubr.bf16.mxu0 0
    %262 = vmatmul.mubr.bf16.gmra.mxu0 %v208
    %v263 = vpop.f32.mrf.mxu0
    %v264 = vadd.f32 %v178, %v263
    %v265 = vpop.f32.mrf.mxu0
    %v266 = vpop.f32.mrf.mxu0
    %v267 = vadd.f32 %v178, %v266
    %v268 = vpop.f32.mrf.mxu0
    %269 = vmatprep.mubr.bf16.mxu0 0
    %270 = vmatmul.mubr.bf16.gmra.mxu0 %v211
    %v271 = vpop.f32.mrf.mxu0
    %v272 = vadd.f32 %v178, %v271
    %v273 = vpop.f32.mrf.mxu0
    %v274 = vpop.f32.mrf.mxu0
    %v275 = vadd.f32 %v178, %v274
    %v276 = vpop.f32.mrf.mxu0
    %277 = vdwg.mxu0
    %v278 = vmax.f32 %v248, 0.0
    %v279 = vmax.f32 %v251, 0.0
    %v280 = vmax.f32 %v256, 0.0
    %v281 = vmax.f32 %v259, 0.0
    %v282 = vmax.f32 %v264, 0.0
    %v283 = vmax.f32 %v267, 0.0
    %v284 = vmax.f32 %v272, 0.0
    %v285 = vmax.f32 %v275, 0.0
    %v286 = vpack.c.bf16 %v279, %v278
    %v287 = vpack.c.bf16 %v281, %v280
    %v288 = vpack.c.bf16 %v283, %v282
    %v289 = vpack.c.bf16 %v285, %v284
    %290 = vmatprep.subr.bf16.mxu0 0
    %291 = vmatpush1.bf16.msra.mxu0 0
    %292 = vmatprep.subr.bf16.mxu0 0
    %293 = vmatpush1.bf16.msra.mxu0 0
    %294 = vmatprep.subr.bf16.mxu0 0
    %295 = vmatpush1.bf16.msra.mxu0 0
    %296 = vmatprep.subr.bf16.mxu0 0
    %297 = vmatpush1.bf16.msra.mxu0 0
    %298 = vmatprep.subr.bf16.mxu0 0
    %299 = vmatpush1.bf16.msra.mxu0 %v289
    %300 = vmatprep.subr.bf16.mxu0 0
    %301 = vmatpush1.bf16.msra.mxu0 %v288
    %302 = vmatprep.subr.bf16.mxu0 0
    %303 = vmatpush1.bf16.msra.mxu0 %v287
    %304 = vmatprep.subr.bf16.mxu0 0
    %305 = vmatpush1.bf16.msra.mxu0 %v286
    %306 = vmatprep.subr.bf16.mxu0 0
    %307 = vmatpush2.bf16.msra.mxu0 0
    %308 = vmatprep.subr.bf16.mxu0 0
    %309 = vmatpush2.bf16.msra.mxu0 0
    %310 = vmatprep.subr.bf16.mxu0 0
    %311 = vmatpush2.bf16.msra.mxu0 0
    %312 = vmatprep.subr.bf16.mxu0 0
    %313 = vmatpush2.bf16.msra.mxu0 0
    %314 = vmatprep.subr.bf16.mxu0 0
    %315 = vmatpush2.bf16.msra.mxu0 0
    %316 = vmatprep.subr.bf16.mxu0 0
    %317 = vmatpush2.bf16.msra.mxu0 0
    %318 = vmatprep.subr.bf16.mxu0 0
    %319 = vmatpush2.bf16.msra.mxu0 0
    %320 = vmatprep.subr.bf16.mxu0 0
    %321 = vmatpush2.bf16.msra.mxu0 0
    %322 = vmatprep.mubr.bf16.mxu0 0
    %323 = vmatmul.mubr.bf16.gmra.mxu0 %v202
    %v324 = vpop.f32.mrf.mxu0
    %v325 = vadd.f32 0.0, %v324
    %v326 = vpop.f32.mrf.mxu0
    %v327 = vpop.f32.mrf.mxu0
    %v328 = vadd.f32 0.0, %v327
    %v329 = vpop.f32.mrf.mxu0
    %330 = vmatprep.mubr.bf16.mxu0 0
    %331 = vmatmul.mubr.bf16.gmra.mxu0 %v205
    %v332 = vpop.f32.mrf.mxu0
    %v333 = vadd.f32 0.0, %v332
    %v334 = vpop.f32.mrf.mxu0
    %v335 = vpop.f32.mrf.mxu0
    %v336 = vadd.f32 0.0, %v335
    %v337 = vpop.f32.mrf.mxu0
    %338 = vmatprep.mubr.bf16.mxu0 0
    %339 = vmatmul.mubr.bf16.gmra.mxu0 %v208
    %v340 = vpop.f32.mrf.mxu0
    %v341 = vadd.f32 0.0, %v340
    %v342 = vpop.f32.mrf.mxu0
    %v343 = vpop.f32.mrf.mxu0
    %v344 = vadd.f32 0.0, %v343
    %v345 = vpop.f32.mrf.mxu0
    %346 = vmatprep.mubr.bf16.mxu0 0
    %347 = vmatmul.mubr.bf16.gmra.mxu0 %v211
    %v348 = vpop.f32.mrf.mxu0
    %v349 = vadd.f32 0.0, %v348
    %v350 = vpop.f32.mrf.mxu0
    %v351 = vpop.f32.mrf.mxu0
    %v352 = vadd.f32 0.0, %v351
    %v353 = vpop.f32.mrf.mxu0
    %354 = vdwg.mxu0
    %v355 = vpack.c.bf16 %v328, %v325
    %v356 = vpack.c.bf16 %v336, %v333
    %v357 = vpack.c.bf16 %v344, %v341
    %v358 = vpack.c.bf16 %v352, %v349
    %v359 = vld [vmem:[%s4] sm:$0xf]
    %v360 = vld [vmem:[%s4 + $0x4] sm:$0xf]
    %v361 = vld [vmem:[%s4 + $0x8] sm:$0xf]
    %v362 = vld [vmem:[%s4 + $0xc] sm:$0xf]
    %v363 = vld [vmem:[%s5] sm:$0x1]
    %v365 = vlaneseq
    %v366 = vshrl.u32 %v365, 7
    %v367 = vsub.s32 0, %v366
    %v368 = vrot.slane %v363, %v367
    %v374 = vunpack.c.l.b16 %v359
    %v375 = vunpack.c.l.b16 %v360
    %v376 = vunpack.c.l.b16 %v361
    %v377 = vunpack.c.l.b16 %v362
    %v378 = vpack.c.b16 %v375, %v374
    %v379 = vpack.c.b16 %v377, %v376
    %vm382 = vcmask 261120
    %v384 = vsel %vm382, %v355, 0
    %v387 = vsel %vm382, %v356, 0
    %v390 = vsel %vm382, %v357, 0
    %v393 = vsel %vm382, %v358, 0
    %395 = vmatprep.subr.bf16.mxu0 0
    %396 = vmatpush1.bf16.msra.mxu0 0
    %397 = vmatprep.subr.bf16.mxu0 0
    %398 = vmatpush1.bf16.msra.mxu0 0
    %399 = vmatprep.subr.bf16.mxu0 0
    %400 = vmatpush1.bf16.msra.mxu0 0
    %401 = vmatprep.subr.bf16.mxu0 0
    %402 = vmatpush1.bf16.msra.mxu0 0
    %403 = vmatprep.subr.bf16.mxu0 0
    %404 = vmatpush1.bf16.msra.mxu0 0
    %405 = vmatprep.subr.bf16.mxu0 0
    %406 = vmatpush1.bf16.msra.mxu0 0
    %407 = vmatprep.subr.bf16.mxu0 0
    %408 = vmatpush1.bf16.msra.mxu0 %v379
    %409 = vmatprep.subr.bf16.mxu0 0
    %410 = vmatpush1.bf16.msra.mxu0 %v378
    %411 = vmatprep.subr.bf16.mxu0 0
    %412 = vmatpush2.bf16.msra.mxu0 0
    %413 = vmatprep.subr.bf16.mxu0 0
    %414 = vmatpush2.bf16.msra.mxu0 0
    %415 = vmatprep.subr.bf16.mxu0 0
    %416 = vmatpush2.bf16.msra.mxu0 0
    %417 = vmatprep.subr.bf16.mxu0 0
    %418 = vmatpush2.bf16.msra.mxu0 0
    %419 = vmatprep.subr.bf16.mxu0 0
    %420 = vmatpush2.bf16.msra.mxu0 0
    %421 = vmatprep.subr.bf16.mxu0 0
    %422 = vmatpush2.bf16.msra.mxu0 0
    %423 = vmatprep.subr.bf16.mxu0 0
    %424 = vmatpush2.bf16.msra.mxu0 0
    %425 = vmatprep.subr.bf16.mxu0 0
    %426 = vmatpush2.bf16.msra.mxu0 0
    %427 = vmatprep.mubr.bf16.mxu0 0
    %428 = vmatmul.mubr.bf16.gmra.mxu0 %v384
    %v429 = vpop.f32.mrf.mxu0
    %v430 = vadd.f32 %v368, %v429
    %v431 = vpop.f32.mrf.mxu0
    %v432 = vpop.f32.mrf.mxu0
    %v433 = vadd.f32 %v368, %v432
    %v434 = vpop.f32.mrf.mxu0
    %435 = vmatprep.mubr.bf16.mxu0 0
    %436 = vmatmul.mubr.bf16.gmra.mxu0 %v387
    %v437 = vpop.f32.mrf.mxu0
    %v438 = vadd.f32 %v368, %v437
    %v439 = vpop.f32.mrf.mxu0
    %v440 = vpop.f32.mrf.mxu0
    %v441 = vadd.f32 %v368, %v440
    %v442 = vpop.f32.mrf.mxu0
    %443 = vmatprep.mubr.bf16.mxu0 0
    %444 = vmatmul.mubr.bf16.gmra.mxu0 %v390
    %v445 = vpop.f32.mrf.mxu0
    %v446 = vadd.f32 %v368, %v445
    %v447 = vpop.f32.mrf.mxu0
    %v448 = vpop.f32.mrf.mxu0
    %v449 = vadd.f32 %v368, %v448
    %v450 = vpop.f32.mrf.mxu0
    %451 = vmatprep.mubr.bf16.mxu0 0
    %452 = vmatmul.mubr.bf16.gmra.mxu0 %v393
    %v453 = vpop.f32.mrf.mxu0
    %v454 = vadd.f32 %v368, %v453
    %v455 = vpop.f32.mrf.mxu0
    %v456 = vpop.f32.mrf.mxu0
    %v457 = vadd.f32 %v368, %v456
    %v458 = vpop.f32.mrf.mxu0
    %459 = vdwg.mxu0
    %v460 = vmax.f32 %v430, 0.0
    %v461 = vmax.f32 %v433, 0.0
    %v462 = vmax.f32 %v438, 0.0
    %v463 = vmax.f32 %v441, 0.0
    %v464 = vmax.f32 %v446, 0.0
    %v465 = vmax.f32 %v449, 0.0
    %v466 = vmax.f32 %v454, 0.0
    %v467 = vmax.f32 %v457, 0.0
    %v468 = vld [vmem:[%s8] sm:$0xf]
    %v469 = vpack.c.bf16 %v461, %v460
    %v470 = vpack.c.bf16 %v463, %v462
    %v471 = vpack.c.bf16 %v465, %v464
    %v472 = vpack.c.bf16 %v467, %v466
    %v474 = vsel %vm200, %v468, 0
    %476 = vmatprep.subr.bf16.mxu0 0
    %477 = vmatpush1.bf16.msra.mxu0 0
    %478 = vmatprep.subr.bf16.mxu0 0
    %479 = vmatpush1.bf16.msra.mxu0 0
    %480 = vmatprep.subr.bf16.mxu0 0
    %481 = vmatpush1.bf16.msra.mxu0 0
    %482 = vmatprep.subr.bf16.mxu0 0
    %483 = vmatpush1.bf16.msra.mxu0 0
    %484 = vmatprep.subr.bf16.mxu0 0
    %485 = vmatpush1.bf16.msra.mxu0 %v472
    %486 = vmatprep.subr.bf16.mxu0 0
    %487 = vmatpush1.bf16.msra.mxu0 %v471
    %488 = vmatprep.subr.bf16.mxu0 0
    %489 = vmatpush1.bf16.msra.mxu0 %v470
    %490 = vmatprep.subr.bf16.mxu0 0
    %491 = vmatpush1.bf16.msra.mxu0 %v469
    %492 = vmatprep.subr.bf16.mxu0 0
    %493 = vmatpush2.bf16.msra.mxu0 0
    %494 = vmatprep.subr.bf16.mxu0 0
    %495 = vmatpush2.bf16.msra.mxu0 0
    %496 = vmatprep.subr.bf16.mxu0 0
    %497 = vmatpush2.bf16.msra.mxu0 0
    %498 = vmatprep.subr.bf16.mxu0 0
    %499 = vmatpush2.bf16.msra.mxu0 0
    %500 = vmatprep.subr.bf16.mxu0 0
    %501 = vmatpush2.bf16.msra.mxu0 0
    %502 = vmatprep.subr.bf16.mxu0 0
    %503 = vmatpush2.bf16.msra.mxu0 0
    %504 = vmatprep.subr.bf16.mxu0 0
    %505 = vmatpush2.bf16.msra.mxu0 0
    %506 = vmatprep.subr.bf16.mxu0 0
    %507 = vmatpush2.bf16.msra.mxu0 0
    %508 = vmatprep.mubr.bf16.mxu0 0
    %509 = vmatmul.mubr.bf16.gmra.mxu0 %v474
    %v510 = vpop.f32.mrf.mxu0
    %v511 = vadd.f32 0.0, %v510
    %v512 = vpop.f32.mrf.mxu0
    %v513 = vpop.f32.mrf.mxu0
    %v514 = vpop.f32.mrf.mxu0
    %515 = vdwg.mxu0
    %v516 = vpack.c.bf16 %v511, %v511
    %v517 = vld [vmem:[%s6] sm:$0xf]
    %v518 = vld [vmem:[%s6 + $0x4] sm:$0xf]
    %v519 = vld [vmem:[%s6 + $0x8] sm:$0xf]
    %v520 = vld [vmem:[%s6 + $0xc] sm:$0xf]
    %v521 = vld [vmem:[%s7] sm:$0x1]
    %v523 = vlaneseq
    %v524 = vshrl.u32 %v523, 7
    %v525 = vsub.s32 0, %v524
    %v526 = vrot.slane %v521, %v525
    %v532 = vunpack.c.l.b16 %v517
    %v533 = vunpack.c.l.b16 %v518
    %v534 = vunpack.c.l.b16 %v519
    %v535 = vunpack.c.l.b16 %v520
    %v536 = vpack.c.b16 %v533, %v532
    %v537 = vpack.c.b16 %v535, %v534
    %v541 = vsel %vm382, %v516, 0
    %543 = vmatprep.subr.bf16.mxu0 0
    %544 = vmatpush1.bf16.msra.mxu0 0
    %545 = vmatprep.subr.bf16.mxu0 0
    %546 = vmatpush1.bf16.msra.mxu0 0
    %547 = vmatprep.subr.bf16.mxu0 0
    %548 = vmatpush1.bf16.msra.mxu0 0
    %549 = vmatprep.subr.bf16.mxu0 0
    %550 = vmatpush1.bf16.msra.mxu0 0
    %551 = vmatprep.subr.bf16.mxu0 0
    %552 = vmatpush1.bf16.msra.mxu0 0
    %553 = vmatprep.subr.bf16.mxu0 0
    %554 = vmatpush1.bf16.msra.mxu0 0
    %555 = vmatprep.subr.bf16.mxu0 0
    %556 = vmatpush1.bf16.msra.mxu0 %v537
    %557 = vmatprep.subr.bf16.mxu0 0
    %558 = vmatpush1.bf16.msra.mxu0 %v536
    %559 = vmatprep.subr.bf16.mxu0 0
    %560 = vmatpush2.bf16.msra.mxu0 0
    %561 = vmatprep.subr.bf16.mxu0 0
    %562 = vmatpush2.bf16.msra.mxu0 0
    %563 = vmatprep.subr.bf16.mxu0 0
    %564 = vmatpush2.bf16.msra.mxu0 0
    %565 = vmatprep.subr.bf16.mxu0 0
    %566 = vmatpush2.bf16.msra.mxu0 0
    %567 = vmatprep.subr.bf16.mxu0 0
    %568 = vmatpush2.bf16.msra.mxu0 0
    %569 = vmatprep.subr.bf16.mxu0 0
    %570 = vmatpush2.bf16.msra.mxu0 0
    %571 = vmatprep.subr.bf16.mxu0 0
    %572 = vmatpush2.bf16.msra.mxu0 0
    %573 = vmatprep.subr.bf16.mxu0 0
    %574 = vmatpush2.bf16.msra.mxu0 0
    %575 = vmatprep.mubr.bf16.mxu0 0
    %576 = vmatmul.mubr.bf16.gmra.mxu0 %v541
    %v577 = vpop.f32.mrf.mxu0
    %v578 = vadd.f32 %v526, %v577
    %v579 = vpop.f32.mrf.mxu0
    %v580 = vpop.f32.mrf.mxu0
    %v581 = vpop.f32.mrf.mxu0
    %582 = vdwg.mxu0
    %vm583 = vcmask 31744
    %584 = vst.msk [vmem:[%s9] sm:$0xff] %vm583, %v578
    // Predicated region
    $region42: #{tpu_custom_call.1} parent=1 // pred_check
      _
    $region43: #{tpu_custom_call.1} parent=1 // pred_check_branch
      %586 = sbr.rel (0) target = $region45
    $region44: #{tpu_custom_call.1} parent=1 // pred_region
      _
    $region45: #{tpu_custom_call.1} parent=1 // pred_fallthru
      _
    // Predicated region
    $region46: #{tpu_custom_call.1} parent=1 // pred_check
      _
    $region47: #{tpu_custom_call.1} parent=1 // pred_check_branch
      %588 = sbr.rel (0) target = $region49
    $region48: #{tpu_custom_call.1} parent=1 // pred_region
      _
    $region49: #{tpu_custom_call.1} parent=1 // pred_fallthru
      _
    %589 = vsyncpa [#allocation3], 1

</llo_original>
